<compile_context>
chip_gen: v6e
topology: v6e:2x2x1
jax: 0.10.0
libtpu: 0.0.40
codegen_flags: <defaults>
</compile_context>

<pallas_src>
import jax
import jax.numpy as jnp
from jax import lax
from jax.experimental import pallas as pl
from jax.experimental.pallas import tpu as pltpu


def lstm_fc_kernel(x_ref, wih_ref, b_ref, whh_ref, wfc_ref, bfc_ref, out_ref):
    """Fused input projection + LSTM recurrence over T steps + Linear head.

    x_ref   : (B, T, N)   batch-first input sequence
    wih_ref : (N, 4H)     W_ih^T
    b_ref   : (1, 4H)     b_ih + b_hh (folded)
    whh_ref : (H, 4H)     W_hh^T
    wfc_ref : (H, O)      W_fc^T
    bfc_ref : (1, O)      b_fc
    out_ref : (B, O)
    """
    B, T, N = x_ref.shape
    H = whh_ref.shape[0]
    G = 4 * H

    # Hoist every weight/bias load out of the unrolled recurrence: one VMEM
    # load each instead of T replicated loads on the serial latency chain.
    w_ih = wih_ref[...]          # (N, 4H)
    bias = b_ref[...]            # (1, 4H)
    w_hh = whh_ref[...]          # (H, 4H)
    w_fc = wfc_ref[...]          # (H, O)
    b_fc = bfc_ref[...]          # (1, O)

    # Fused input projection for ALL timesteps: a single MXU matmul inside the
    # kernel, so gates_x never round-trips through HBM.  The reshapes only
    # merge/split the sublane dimension with an 8-aligned inner factor
    # (layout-preserving, no data movement).
    x2 = x_ref[...].reshape(B * T, N)                                   # (B*T, N)
    gx = (jnp.dot(x2, w_ih, preferred_element_type=jnp.float32) + bias
          ).reshape(B, T, G)                                            # (B, T, 4H)

    h = jnp.zeros((B, H), jnp.float32)   # torch.zeros initial hidden
    c = jnp.zeros((B, H), jnp.float32)   # torch.zeros initial cell

    # T is small and static -> straight-line unrolled recurrence with static
    # slices; h/c live in vregs (no per-step VMEM round trip).
    # TODO(synk): at large T switch to a T-tiled grid (h/c in VMEM scratch,
    # @pl.when init) or a bounded-unroll fori_loop instead of full unroll.
    for t in range(T):
        # One MXU matmul per step; x-projection + bias already folded into gx.
        gates = gx[:, t, :] + jnp.dot(h, w_hh,
                                      preferred_element_type=jnp.float32)  # (B, 4H)
        # Whole-tile nonlinearities: 2 EUP passes over the 128-lane gate tile.
        sig = jax.nn.sigmoid(gates)
        th = jnp.tanh(gates)
        i = sig[:, 0 * H:1 * H]
        f = sig[:, 1 * H:2 * H]
        g = th[:, 2 * H:3 * H]
        o = sig[:, 3 * H:4 * H]
        c = f * c + i * g
        h = o * jnp.tanh(c)

    # Dropout is identity in eval mode; fc applied to out[:, -1] == h_T.
    out_ref[...] = jnp.dot(h, w_fc, preferred_element_type=jnp.float32) + b_fc


def base_rnn_lstm_forward(x, params):
    """x: (B, T, N) float32 (batch_first, like PyTorch). Returns (B, O)."""
    w_ih_t, w_hh_t, b, w_fc_t, b_fc = params
    B, T, N = x.shape
    H = w_hh_t.shape[0]
    O = w_fc_t.shape[1]

    cost = pl.CostEstimate(
        flops=(2 * B * T * N * 4 * H        # fused input projection
               + 2 * T * B * 4 * H * H      # recurrent matmuls
               + 2 * B * H * O),            # fc head
        transcendentals=T * B * (2 * 4 * H + H),
        bytes_accessed=4 * (x.size + w_ih_t.size + b.size + w_hh_t.size
                            + w_fc_t.size + b_fc.size + B * O),
    )

    vmem = pl.BlockSpec(memory_space=pltpu.MemorySpace.VMEM)
    return pl.pallas_call(
        lstm_fc_kernel,
        out_shape=jax.ShapeDtypeStruct((B, O), jnp.float32),
        in_specs=[vmem] * 6,
        out_specs=vmem,
        cost_estimate=cost,
    )(x, w_ih_t, b, w_hh_t, w_fc_t, b_fc)


def lstm_ref(x, params):
    """Pure-JAX reference mirroring torch.nn.LSTM + Linear semantics."""
    w_ih_t, w_hh_t, b, w_fc_t, b_fc = params
    B, T, N = x.shape
    H = w_hh_t.shape[0]
    h = jnp.zeros((B, H), jnp.float32)
    c = jnp.zeros((B, H), jnp.float32)
    for t in range(T):
        gates = x[:, t] @ w_ih_t + h @ w_hh_t + b
        i = jax.nn.sigmoid(gates[:, 0 * H:1 * H])
        f = jax.nn.sigmoid(gates[:, 1 * H:2 * H])
        g = jnp.tanh(gates[:, 2 * H:3 * H])
        o = jax.nn.sigmoid(gates[:, 3 * H:4 * H])
        c = f * c + i * g
        h = o * jnp.tanh(c)
    return h @ w_fc_t + b_fc


def init_params(key, num_sensors, hidden_size, output_size):
    """Deterministic init matching PyTorch shapes: LSTM uses U(-k, k), k=1/sqrt(H)."""
    H, N, O = hidden_size, num_sensors, output_size
    k = 1.0 / jnp.sqrt(jnp.float32(H))
    ks = jax.random.split(key, 6)
    w_ih = jax.random.uniform(ks[0], (4 * H, N), jnp.float32, -k, k)   # weight_ih_l0
    w_hh = jax.random.uniform(ks[1], (4 * H, H), jnp.float32, -k, k)   # weight_hh_l0
    b_ih = jax.random.uniform(ks[2], (4 * H,), jnp.float32, -k, k)     # bias_ih_l0
    b_hh = jax.random.uniform(ks[3], (4 * H,), jnp.float32, -k, k)     # bias_hh_l0
    w_fc = jax.random.uniform(ks[4], (O, H), jnp.float32, -k, k)       # fc.weight
    b_fc = jax.random.uniform(ks[5], (O,), jnp.float32, -k, k)         # fc.bias
    # Pre-transpose / fold for the kernel.
    return (w_ih.T,                      # (N, 4H)
            w_hh.T,                      # (H, 4H)
            (b_ih + b_hh)[None, :],      # (1, 4H)
            w_fc.T,                      # (H, O)
            b_fc[None, :])               # (1, O)


if __name__ == "__main__":
    # Small shapes consistent with BaseRNN: num_sensors=4, hidden=32, seq=8,
    # batch=2, output_size=8, num_layers=1, arch='lstm'.
    B, T, N, H, O = 2, 8, 4, 32, 8

    key = jax.random.PRNGKey(0)
    kx, kp = jax.random.split(key)
    x = jax.random.normal(kx, (B, T, N), jnp.float32)   # (batch, seq, num_sensors)
    params = init_params(kp, N, H, O)

    out = jax.block_until_ready(base_rnn_lstm_forward(x, params))
    ref = lstm_ref(x, params)
    assert out.shape == (B, O)
    assert jnp.allclose(out, ref, atol=1e-4, rtol=1e-4), (out, ref)

    # TODO(synk): training-mode dropout (stochastic masking via pltpu.prng_*) not
    # implemented; inference semantics (identity) are used, matching eval().
    print("KERNEL_OK")
</pallas_src>

<mosaic_0001>
module attributes {stable_mosaic.version = 11 : i64} {
  func.func @lstm_fc_kernel(%arg0: memref<2x8x4xf32, #tpu.memory_space<vmem>>, %arg1: memref<4x128xf32, #tpu.memory_space<vmem>>, %arg2: memref<1x128xf32, #tpu.memory_space<vmem>>, %arg3: memref<32x128xf32, #tpu.memory_space<vmem>>, %arg4: memref<32x8xf32, #tpu.memory_space<vmem>>, %arg5: memref<1x8xf32, #tpu.memory_space<vmem>>, %arg6: memref<2x8xf32, #tpu.memory_space<vmem>>) attributes {dimension_semantics = [], scalar_prefetch = 0 : i64, scratch_operands = 0 : i64, tpu.core_type = #tpu.core_type<tc>} {
    %c0 = arith.constant 0 : index
    %c0_0 = arith.constant 0 : index
    %0 = vector.load %arg1[%c0, %c0_0] : memref<4x128xf32, #tpu.memory_space<vmem>>, vector<4x128xf32>
    %c0_1 = arith.constant 0 : index
    %c0_2 = arith.constant 0 : index
    %1 = vector.load %arg2[%c0_1, %c0_2] : memref<1x128xf32, #tpu.memory_space<vmem>>, vector<1x128xf32>
    %c0_3 = arith.constant 0 : index
    %c0_4 = arith.constant 0 : index
    %2 = vector.load %arg3[%c0_3, %c0_4] : memref<32x128xf32, #tpu.memory_space<vmem>>, vector<32x128xf32>
    %c0_5 = arith.constant 0 : index
    %c0_6 = arith.constant 0 : index
    %3 = vector.load %arg4[%c0_5, %c0_6] : memref<32x8xf32, #tpu.memory_space<vmem>>, vector<32x8xf32>
    %c0_7 = arith.constant 0 : index
    %c0_8 = arith.constant 0 : index
    %4 = vector.load %arg5[%c0_7, %c0_8] : memref<1x8xf32, #tpu.memory_space<vmem>>, vector<1x8xf32>
    %c0_9 = arith.constant 0 : index
    %c0_10 = arith.constant 0 : index
    %c0_11 = arith.constant 0 : index
    %5 = vector.load %arg0[%c0_9, %c0_10, %c0_11] : memref<2x8x4xf32, #tpu.memory_space<vmem>>, vector<2x8x4xf32>
    %6 = vector.shape_cast %5 : vector<2x8x4xf32> to vector<16x4xf32>
    %cst = arith.constant dense<0.000000e+00> : vector<16x128xf32>
    %7 = tpu.matmul %6, %0, %cst {dimension_numbers = #tpu.dot_dimension_numbers<[1], [0], [0], [1], [0, 0, 1, 1], [], []>} : vector<16x4xf32>, vector<4x128xf32>, vector<16x128xf32> -> vector<16x128xf32>
    %8 = vector.broadcast %1 : vector<1x128xf32> to vector<16x128xf32>
    %9 = arith.addf %7, %8 : vector<16x128xf32>
    %10 = vector.shape_cast %9 : vector<16x128xf32> to vector<2x8x128xf32>
    %cst_12 = arith.constant 0.000000e+00 : f32
    %11 = vector.broadcast %cst_12 : f32 to vector<2x32xf32>
    %cst_13 = arith.constant 0.000000e+00 : f32
    %12 = vector.broadcast %cst_13 : f32 to vector<2x32xf32>
    %13 = vector.extract_strided_slice %10 {offsets = [0, 0, 0], sizes = [2, 1, 128], strides = [1, 1, 1]} : vector<2x8x128xf32> to vector<2x1x128xf32>
    %14 = vector.shape_cast %13 : vector<2x1x128xf32> to vector<2x128xf32>
    %cst_14 = arith.constant dense<0.000000e+00> : vector<2x128xf32>
    %15 = tpu.matmul %11, %2, %cst_14 {dimension_numbers = #tpu.dot_dimension_numbers<[1], [0], [0], [1], [0, 0, 1, 1], [], []>} : vector<2x32xf32>, vector<32x128xf32>, vector<2x128xf32> -> vector<2x128xf32>
    %16 = arith.addf %14, %15 : vector<2x128xf32>
    %17 = arith.negf %16 : vector<2x128xf32>
    %18 = math.exp %17 : vector<2x128xf32>
    %cst_15 = arith.constant 1.000000e+00 : f32
    %19 = vector.broadcast %cst_15 : f32 to vector<2x128xf32>
    %20 = arith.addf %19, %18 : vector<2x128xf32>
    %21 = arith.divf %19, %20 : vector<2x128xf32>
    %22 = math.tanh %16 : vector<2x128xf32>
    %23 = vector.extract_strided_slice %21 {offsets = [0, 0], sizes = [2, 32], strides = [1, 1]} : vector<2x128xf32> to vector<2x32xf32>
    %24 = vector.extract_strided_slice %21 {offsets = [0, 32], sizes = [2, 32], strides = [1, 1]} : vector<2x128xf32> to vector<2x32xf32>
    %25 = vector.extract_strided_slice %22 {offsets = [0, 64], sizes = [2, 32], strides = [1, 1]} : vector<2x128xf32> to vector<2x32xf32>
    %26 = vector.extract_strided_slice %21 {offsets = [0, 96], sizes = [2, 32], strides = [1, 1]} : vector<2x128xf32> to vector<2x32xf32>
    %27 = arith.mulf %24, %12 : vector<2x32xf32>
    %28 = arith.mulf %23, %25 : vector<2x32xf32>
    %29 = arith.addf %27, %28 : vector<2x32xf32>
    %30 = math.tanh %29 : vector<2x32xf32>
    %31 = arith.mulf %26, %30 : vector<2x32xf32>
    %32 = vector.extract_strided_slice %10 {offsets = [0, 1, 0], sizes = [2, 1, 128], strides = [1, 1, 1]} : vector<2x8x128xf32> to vector<2x1x128xf32>
    %33 = vector.shape_cast %32 : vector<2x1x128xf32> to vector<2x128xf32>
    %cst_16 = arith.constant dense<0.000000e+00> : vector<2x128xf32>
    %34 = tpu.matmul %31, %2, %cst_16 {dimension_numbers = #tpu.dot_dimension_numbers<[1], [0], [0], [1], [0, 0, 1, 1], [], []>} : vector<2x32xf32>, vector<32x128xf32>, vector<2x128xf32> -> vector<2x128xf32>
    %35 = arith.addf %33, %34 : vector<2x128xf32>
    %36 = arith.negf %35 : vector<2x128xf32>
    %37 = math.exp %36 : vector<2x128xf32>
    %cst_17 = arith.constant 1.000000e+00 : f32
    %38 = vector.broadcast %cst_17 : f32 to vector<2x128xf32>
    %39 = arith.addf %38, %37 : vector<2x128xf32>
    %40 = arith.divf %38, %39 : vector<2x128xf32>
    %41 = math.tanh %35 : vector<2x128xf32>
    %42 = vector.extract_strided_slice %40 {offsets = [0, 0], sizes = [2, 32], strides = [1, 1]} : vector<2x128xf32> to vector<2x32xf32>
    %43 = vector.extract_strided_slice %40 {offsets = [0, 32], sizes = [2, 32], strides = [1, 1]} : vector<2x128xf32> to vector<2x32xf32>
    %44 = vector.extract_strided_slice %41 {offsets = [0, 64], sizes = [2, 32], strides = [1, 1]} : vector<2x128xf32> to vector<2x32xf32>
    %45 = vector.extract_strided_slice %40 {offsets = [0, 96], sizes = [2, 32], strides = [1, 1]} : vector<2x128xf32> to vector<2x32xf32>
    %46 = arith.mulf %43, %29 : vector<2x32xf32>
    %47 = arith.mulf %42, %44 : vector<2x32xf32>
    %48 = arith.addf %46, %47 : vector<2x32xf32>
    %49 = math.tanh %48 : vector<2x32xf32>
    %50 = arith.mulf %45, %49 : vector<2x32xf32>
    %51 = vector.extract_strided_slice %10 {offsets = [0, 2, 0], sizes = [2, 1, 128], strides = [1, 1, 1]} : vector<2x8x128xf32> to vector<2x1x128xf32>
    %52 = vector.shape_cast %51 : vector<2x1x128xf32> to vector<2x128xf32>
    %cst_18 = arith.constant dense<0.000000e+00> : vector<2x128xf32>
    %53 = tpu.matmul %50, %2, %cst_18 {dimension_numbers = #tpu.dot_dimension_numbers<[1], [0], [0], [1], [0, 0, 1, 1], [], []>} : vector<2x32xf32>, vector<32x128xf32>, vector<2x128xf32> -> vector<2x128xf32>
    %54 = arith.addf %52, %53 : vector<2x128xf32>
    %55 = arith.negf %54 : vector<2x128xf32>
    %56 = math.exp %55 : vector<2x128xf32>
    %cst_19 = arith.constant 1.000000e+00 : f32
    %57 = vector.broadcast %cst_19 : f32 to vector<2x128xf32>
    %58 = arith.addf %57, %56 : vector<2x128xf32>
    %59 = arith.divf %57, %58 : vector<2x128xf32>
    %60 = math.tanh %54 : vector<2x128xf32>
    %61 = vector.extract_strided_slice %59 {offsets = [0, 0], sizes = [2, 32], strides = [1, 1]} : vector<2x128xf32> to vector<2x32xf32>
    %62 = vector.extract_strided_slice %59 {offsets = [0, 32], sizes = [2, 32], strides = [1, 1]} : vector<2x128xf32> to vector<2x32xf32>
    %63 = vector.extract_strided_slice %60 {offsets = [0, 64], sizes = [2, 32], strides = [1, 1]} : vector<2x128xf32> to vector<2x32xf32>
    %64 = vector.extract_strided_slice %59 {offsets = [0, 96], sizes = [2, 32], strides = [1, 1]} : vector<2x128xf32> to vector<2x32xf32>
    %65 = arith.mulf %62, %48 : vector<2x32xf32>
    %66 = arith.mulf %61, %63 : vector<2x32xf32>
    %67 = arith.addf %65, %66 : vector<2x32xf32>
    %68 = math.tanh %67 : vector<2x32xf32>
    %69 = arith.mulf %64, %68 : vector<2x32xf32>
    %70 = vector.extract_strided_slice %10 {offsets = [0, 3, 0], sizes = [2, 1, 128], strides = [1, 1, 1]} : vector<2x8x128xf32> to vector<2x1x128xf32>
    %71 = vector.shape_cast %70 : vector<2x1x128xf32> to vector<2x128xf32>
    %cst_20 = arith.constant dense<0.000000e+00> : vector<2x128xf32>
    %72 = tpu.matmul %69, %2, %cst_20 {dimension_numbers = #tpu.dot_dimension_numbers<[1], [0], [0], [1], [0, 0, 1, 1], [], []>} : vector<2x32xf32>, vector<32x128xf32>, vector<2x128xf32> -> vector<2x128xf32>
    %73 = arith.addf %71, %72 : vector<2x128xf32>
    %74 = arith.negf %73 : vector<2x128xf32>
    %75 = math.exp %74 : vector<2x128xf32>
    %cst_21 = arith.constant 1.000000e+00 : f32
    %76 = vector.broadcast %cst_21 : f32 to vector<2x128xf32>
    %77 = arith.addf %76, %75 : vector<2x128xf32>
    %78 = arith.divf %76, %77 : vector<2x128xf32>
    %79 = math.tanh %73 : vector<2x128xf32>
    %80 = vector.extract_strided_slice %78 {offsets = [0, 0], sizes = [2, 32], strides = [1, 1]} : vector<2x128xf32> to vector<2x32xf32>
    %81 = vector.extract_strided_slice %78 {offsets = [0, 32], sizes = [2, 32], strides = [1, 1]} : vector<2x128xf32> to vector<2x32xf32>
    %82 = vector.extract_strided_slice %79 {offsets = [0, 64], sizes = [2, 32], strides = [1, 1]} : vector<2x128xf32> to vector<2x32xf32>
    %83 = vector.extract_strided_slice %78 {offsets = [0, 96], sizes = [2, 32], strides = [1, 1]} : vector<2x128xf32> to vector<2x32xf32>
    %84 = arith.mulf %81, %67 : vector<2x32xf32>
    %85 = arith.mulf %80, %82 : vector<2x32xf32>
    %86 = arith.addf %84, %85 : vector<2x32xf32>
    %87 = math.tanh %86 : vector<2x32xf32>
    %88 = arith.mulf %83, %87 : vector<2x32xf32>
    %89 = vector.extract_strided_slice %10 {offsets = [0, 4, 0], sizes = [2, 1, 128], strides = [1, 1, 1]} : vector<2x8x128xf32> to vector<2x1x128xf32>
    %90 = vector.shape_cast %89 : vector<2x1x128xf32> to vector<2x128xf32>
    %cst_22 = arith.constant dense<0.000000e+00> : vector<2x128xf32>
    %91 = tpu.matmul %88, %2, %cst_22 {dimension_numbers = #tpu.dot_dimension_numbers<[1], [0], [0], [1], [0, 0, 1, 1], [], []>} : vector<2x32xf32>, vector<32x128xf32>, vector<2x128xf32> -> vector<2x128xf32>
    %92 = arith.addf %90, %91 : vector<2x128xf32>
    %93 = arith.negf %92 : vector<2x128xf32>
    %94 = math.exp %93 : vector<2x128xf32>
    %cst_23 = arith.constant 1.000000e+00 : f32
    %95 = vector.broadcast %cst_23 : f32 to vector<2x128xf32>
    %96 = arith.addf %95, %94 : vector<2x128xf32>
    %97 = arith.divf %95, %96 : vector<2x128xf32>
    %98 = math.tanh %92 : vector<2x128xf32>
    %99 = vector.extract_strided_slice %97 {offsets = [0, 0], sizes = [2, 32], strides = [1, 1]} : vector<2x128xf32> to vector<2x32xf32>
    %100 = vector.extract_strided_slice %97 {offsets = [0, 32], sizes = [2, 32], strides = [1, 1]} : vector<2x128xf32> to vector<2x32xf32>
    %101 = vector.extract_strided_slice %98 {offsets = [0, 64], sizes = [2, 32], strides = [1, 1]} : vector<2x128xf32> to vector<2x32xf32>
    %102 = vector.extract_strided_slice %97 {offsets = [0, 96], sizes = [2, 32], strides = [1, 1]} : vector<2x128xf32> to vector<2x32xf32>
    %103 = arith.mulf %100, %86 : vector<2x32xf32>
    %104 = arith.mulf %99, %101 : vector<2x32xf32>
    %105 = arith.addf %103, %104 : vector<2x32xf32>
    %106 = math.tanh %105 : vector<2x32xf32>
    %107 = arith.mulf %102, %106 : vector<2x32xf32>
    %108 = vector.extract_strided_slice %10 {offsets = [0, 5, 0], sizes = [2, 1, 128], strides = [1, 1, 1]} : vector<2x8x128xf32> to vector<2x1x128xf32>
    %109 = vector.shape_cast %108 : vector<2x1x128xf32> to vector<2x128xf32>
    %cst_24 = arith.constant dense<0.000000e+00> : vector<2x128xf32>
    %110 = tpu.matmul %107, %2, %cst_24 {dimension_numbers = #tpu.dot_dimension_numbers<[1], [0], [0], [1], [0, 0, 1, 1], [], []>} : vector<2x32xf32>, vector<32x128xf32>, vector<2x128xf32> -> vector<2x128xf32>
    %111 = arith.addf %109, %110 : vector<2x128xf32>
    %112 = arith.negf %111 : vector<2x128xf32>
    %113 = math.exp %112 : vector<2x128xf32>
    %cst_25 = arith.constant 1.000000e+00 : f32
    %114 = vector.broadcast %cst_25 : f32 to vector<2x128xf32>
    %115 = arith.addf %114, %113 : vector<2x128xf32>
    %116 = arith.divf %114, %115 : vector<2x128xf32>
    %117 = math.tanh %111 : vector<2x128xf32>
    %118 = vector.extract_strided_slice %116 {offsets = [0, 0], sizes = [2, 32], strides = [1, 1]} : vector<2x128xf32> to vector<2x32xf32>
    %119 = vector.extract_strided_slice %116 {offsets = [0, 32], sizes = [2, 32], strides = [1, 1]} : vector<2x128xf32> to vector<2x32xf32>
    %120 = vector.extract_strided_slice %117 {offsets = [0, 64], sizes = [2, 32], strides = [1, 1]} : vector<2x128xf32> to vector<2x32xf32>
    %121 = vector.extract_strided_slice %116 {offsets = [0, 96], sizes = [2, 32], strides = [1, 1]} : vector<2x128xf32> to vector<2x32xf32>
    %122 = arith.mulf %119, %105 : vector<2x32xf32>
    %123 = arith.mulf %118, %120 : vector<2x32xf32>
    %124 = arith.addf %122, %123 : vector<2x32xf32>
    %125 = math.tanh %124 : vector<2x32xf32>
    %126 = arith.mulf %121, %125 : vector<2x32xf32>
    %127 = vector.extract_strided_slice %10 {offsets = [0, 6, 0], sizes = [2, 1, 128], strides = [1, 1, 1]} : vector<2x8x128xf32> to vector<2x1x128xf32>
    %128 = vector.shape_cast %127 : vector<2x1x128xf32> to vector<2x128xf32>
    %cst_26 = arith.constant dense<0.000000e+00> : vector<2x128xf32>
    %129 = tpu.matmul %126, %2, %cst_26 {dimension_numbers = #tpu.dot_dimension_numbers<[1], [0], [0], [1], [0, 0, 1, 1], [], []>} : vector<2x32xf32>, vector<32x128xf32>, vector<2x128xf32> -> vector<2x128xf32>
    %130 = arith.addf %128, %129 : vector<2x128xf32>
    %131 = arith.negf %130 : vector<2x128xf32>
    %132 = math.exp %131 : vector<2x128xf32>
    %cst_27 = arith.constant 1.000000e+00 : f32
    %133 = vector.broadcast %cst_27 : f32 to vector<2x128xf32>
    %134 = arith.addf %133, %132 : vector<2x128xf32>
    %135 = arith.divf %133, %134 : vector<2x128xf32>
    %136 = math.tanh %130 : vector<2x128xf32>
    %137 = vector.extract_strided_slice %135 {offsets = [0, 0], sizes = [2, 32], strides = [1, 1]} : vector<2x128xf32> to vector<2x32xf32>
    %138 = vector.extract_strided_slice %135 {offsets = [0, 32], sizes = [2, 32], strides = [1, 1]} : vector<2x128xf32> to vector<2x32xf32>
    %139 = vector.extract_strided_slice %136 {offsets = [0, 64], sizes = [2, 32], strides = [1, 1]} : vector<2x128xf32> to vector<2x32xf32>
    %140 = vector.extract_strided_slice %135 {offsets = [0, 96], sizes = [2, 32], strides = [1, 1]} : vector<2x128xf32> to vector<2x32xf32>
    %141 = arith.mulf %138, %124 : vector<2x32xf32>
    %142 = arith.mulf %137, %139 : vector<2x32xf32>
    %143 = arith.addf %141, %142 : vector<2x32xf32>
    %144 = math.tanh %143 : vector<2x32xf32>
    %145 = arith.mulf %140, %144 : vector<2x32xf32>
    %146 = vector.extract_strided_slice %10 {offsets = [0, 7, 0], sizes = [2, 1, 128], strides = [1, 1, 1]} : vector<2x8x128xf32> to vector<2x1x128xf32>
    %147 = vector.shape_cast %146 : vector<2x1x128xf32> to vector<2x128xf32>
    %cst_28 = arith.constant dense<0.000000e+00> : vector<2x128xf32>
    %148 = tpu.matmul %145, %2, %cst_28 {dimension_numbers = #tpu.dot_dimension_numbers<[1], [0], [0], [1], [0, 0, 1, 1], [], []>} : vector<2x32xf32>, vector<32x128xf32>, vector<2x128xf32> -> vector<2x128xf32>
    %149 = arith.addf %147, %148 : vector<2x128xf32>
    %150 = arith.negf %149 : vector<2x128xf32>
    %151 = math.exp %150 : vector<2x128xf32>
    %cst_29 = arith.constant 1.000000e+00 : f32
    %152 = vector.broadcast %cst_29 : f32 to vector<2x128xf32>
    %153 = arith.addf %152, %151 : vector<2x128xf32>
    %154 = arith.divf %152, %153 : vector<2x128xf32>
    %155 = math.tanh %149 : vector<2x128xf32>
    %156 = vector.extract_strided_slice %154 {offsets = [0, 0], sizes = [2, 32], strides = [1, 1]} : vector<2x128xf32> to vector<2x32xf32>
    %157 = vector.extract_strided_slice %154 {offsets = [0, 32], sizes = [2, 32], strides = [1, 1]} : vector<2x128xf32> to vector<2x32xf32>
    %158 = vector.extract_strided_slice %155 {offsets = [0, 64], sizes = [2, 32], strides = [1, 1]} : vector<2x128xf32> to vector<2x32xf32>
    %159 = vector.extract_strided_slice %154 {offsets = [0, 96], sizes = [2, 32], strides = [1, 1]} : vector<2x128xf32> to vector<2x32xf32>
    %160 = arith.mulf %157, %143 : vector<2x32xf32>
    %161 = arith.mulf %156, %158 : vector<2x32xf32>
    %162 = arith.addf %160, %161 : vector<2x32xf32>
    %163 = math.tanh %162 : vector<2x32xf32>
    %164 = arith.mulf %159, %163 : vector<2x32xf32>
    %cst_30 = arith.constant dense<0.000000e+00> : vector<2x8xf32>
    %165 = tpu.matmul %164, %3, %cst_30 {dimension_numbers = #tpu.dot_dimension_numbers<[1], [0], [0], [1], [0, 0, 1, 1], [], []>} : vector<2x32xf32>, vector<32x8xf32>, vector<2x8xf32> -> vector<2x8xf32>
    %166 = vector.broadcast %4 : vector<1x8xf32> to vector<2x8xf32>
    %167 = arith.addf %165, %166 : vector<2x8xf32>
    %c0_31 = arith.constant 0 : index
    %c0_32 = arith.constant 0 : index
    %168 = vector.load %arg6[%c0_31, %c0_32] : memref<2x8xf32, #tpu.memory_space<vmem>>, vector<2x8xf32>
    tpu.vector_store %arg6[%c0_31, %c0_32], %167 {strides = array<i32>} : memref<2x8xf32, #tpu.memory_space<vmem>>, vector<2x8xf32>,
    return
  }
}

</mosaic_0001>

<llo_original>
// kernel: tpu_custom_call.1
$region0: #{tpu_custom_call.1}
  #allocation0 [shape = 'u32[]', space=smem, size = 0x4, offset = 0x4, fixed_abs, tag = 'smem constant byte address 0x4 - core index']
  #allocation1 [shape = 'u32[144,128]{1,0:T(1,128)}', space=vmem, size = 0x12000, scoped, tag = 'internal scratch']
  %s0 = inlined_call_operand.vmem [shape: f32[2,8,4], index: 0, kind: input, shape index: {}]
  %s1 = inlined_call_operand.vmem [shape: f32[4,128], index: 1, kind: input, shape index: {}]
  %s2 = inlined_call_operand.vmem [shape: f32[1,128], index: 2, kind: input, shape index: {}]
  %s3 = inlined_call_operand.vmem [shape: f32[32,128], index: 3, kind: input, shape index: {}]
  %s4 = inlined_call_operand.vmem [shape: f32[32,8], index: 4, kind: input, shape index: {}]
  %s5 = inlined_call_operand.vmem [shape: f32[1,8], index: 5, kind: input, shape index: {}]
  %s6 = inlined_call_operand.hbm [shape: f32[2,8], index: 6, kind: output, shape index: {}]
  %s7 = sld [smem:[#allocation0]]
  $region34: #{tpu_custom_call.1} parent=0
    _
  %s9 = ssub.s32 1, %s7
  %s10 = scalar_select 0, %s9, %s7
  $region1: #{tpu_custom_call.1} parent=0
    #allocation2 [shape = 'u8[1024]{0}', space=vmem, size = 0x400, scoped, tag = 'output window, operand 0, single buffered']
    #allocation3 [shape = 's32[1]{0}', space=sflag, size = 0x4, scoped, tag = 'scoped memory for tpu_custom_call.1']
    %11 = vsyncpa [#allocation3], 0
    // Predicated region
    $region2: #{tpu_custom_call.1} parent=1 // pred_check
      _
    $region3: #{tpu_custom_call.1} parent=1 // pred_check_branch
      %13 = sbr.rel (0) target = $region5
    $region4: #{tpu_custom_call.1} parent=1 // pred_region
      _
    $region5: #{tpu_custom_call.1} parent=1 // pred_fallthru
      _
    // Predicated region
    $region6: #{tpu_custom_call.1} parent=1 // pred_check
      _
    $region7: #{tpu_custom_call.1} parent=1 // pred_check_branch
      %15 = sbr.rel (0) target = $region9
    $region8: #{tpu_custom_call.1} parent=1 // pred_region
      _
    $region9: #{tpu_custom_call.1} parent=1 // pred_fallthru
      _
    // Predicated region
    $region10: #{tpu_custom_call.1} parent=1 // pred_check
      _
    $region11: #{tpu_custom_call.1} parent=1 // pred_check_branch
      %17 = sbr.rel (0) target = $region13
    $region12: #{tpu_custom_call.1} parent=1 // pred_region
      _
    $region13: #{tpu_custom_call.1} parent=1 // pred_fallthru
      _
    // Predicated region
    $region14: #{tpu_custom_call.1} parent=1 // pred_check
      _
    $region15: #{tpu_custom_call.1} parent=1 // pred_check_branch
      %19 = sbr.rel (0) target = $region17
    $region16: #{tpu_custom_call.1} parent=1 // pred_region
      _
    $region17: #{tpu_custom_call.1} parent=1 // pred_fallthru
      _
    // Predicated region
    $region18: #{tpu_custom_call.1} parent=1 // pred_check
      _
    $region19: #{tpu_custom_call.1} parent=1 // pred_check_branch
      %21 = sbr.rel (0) target = $region21
    $region20: #{tpu_custom_call.1} parent=1 // pred_region
      _
    $region21: #{tpu_custom_call.1} parent=1 // pred_fallthru
      _
    // Predicated region
    $region22: #{tpu_custom_call.1} parent=1 // pred_check
      _
    $region23: #{tpu_custom_call.1} parent=1 // pred_check_branch
      %23 = sbr.rel (0) target = $region25
    $region24: #{tpu_custom_call.1} parent=1 // pred_region
      _
    $region25: #{tpu_custom_call.1} parent=1 // pred_fallthru
      _
    %v24 = vld [vmem:[%s1] sm:$0xf]
    %v25 = vld [vmem:[%s2] sm:$0x1]
    %v26 = vld [vmem:[%s3] sm:$0xff]
    %v27 = vld [vmem:[%s3 + $0x8] sm:$0xff]
    %v28 = vld [vmem:[%s3 + $0x10] sm:$0xff]
    %v29 = vld [vmem:[%s3 + $0x18] sm:$0xff]
    %v30 = vld [vmem:[%s4] sm:$0xff]
    %v31 = vld [vmem:[%s4 + $0x8] sm:$0xff]
    %v32 = vld [vmem:[%s4 + $0x10] sm:$0xff]
    %v33 = vld [vmem:[%s4 + $0x18] sm:$0xff]
    %v34 = vld [vmem:[%s5] sm:$0x1]
    %v35 = vld [vmem:[%s0] sm:$0xff]
    %v36 = vld [vmem:[%s0 + $0x8] sm:$0xff]
    %v38 = vlaneseq
    %v39 = vshrl.u32 %v38, 7
    %v40 = vsub.s32 0, %v39
    %v41 = vrot.slane %v25, %v40
    %vm43 = vcmask 31744
    %v45 = vsel %vm43, %v35, 0
    %v48 = vsel %vm43, %v36, 0
    %vm50 = vcmask 1043456
    %v52 = vsel %vm50, %v24, 0
    %54 = vmatprep.subr.mxu0 0.0
    %55 = vmatpush1.msra.mxu0 0.0
    %56 = vmatprep.subr.mxu0 0.0
    %57 = vmatpush1.msra.mxu0 0.0
    %58 = vmatprep.subr.mxu0 0.0
    %59 = vmatpush1.msra.mxu0 0.0
    %60 = vmatprep.subr.mxu0 0.0
    %61 = vmatpush1.msra.mxu0 0.0
    %62 = vmatprep.subr.mxu0 0.0
    %63 = vmatpush1.msra.mxu0 0.0
    %64 = vmatprep.subr.mxu0 0.0
    %65 = vmatpush1.msra.mxu0 0.0
    %66 = vmatprep.subr.mxu0 0.0
    %67 = vmatpush1.msra.mxu0 0.0
    %68 = vmatprep.subr.mxu0 0.0
    %69 = vmatpush1.msra.mxu0 0.0
    %70 = vmatprep.subr.mxu0 0.0
    %71 = vmatpush1.msra.mxu0 0.0
    %72 = vmatprep.subr.mxu0 0.0
    %73 = vmatpush1.msra.mxu0 0.0
    %74 = vmatprep.subr.mxu0 0.0
    %75 = vmatpush1.msra.mxu0 0.0
    %76 = vmatprep.subr.mxu0 0.0
    %77 = vmatpush1.msra.mxu0 0.0
    %78 = vmatprep.subr.mxu0 0.0
    %79 = vmatpush1.msra.mxu0 0.0
    %80 = vmatprep.subr.mxu0 0.0
    %81 = vmatpush1.msra.mxu0 0.0
    %82 = vmatprep.subr.mxu0 0.0
    %83 = vmatpush1.msra.mxu0 0.0
    %84 = vmatprep.subr.mxu0 0.0
    %85 = vmatpush1.msra.mxu0 %v52
    %86 = vmatprep.subr.mxu0 0.0
    %87 = vmatpush2.msra.mxu0 0.0
    %88 = vmatprep.subr.mxu0 0.0
    %89 = vmatpush2.msra.mxu0 0.0
    %90 = vmatprep.subr.mxu0 0.0
    %91 = vmatpush2.msra.mxu0 0.0
    %92 = vmatprep.subr.mxu0 0.0
    %93 = vmatpush2.msra.mxu0 0.0
    %94 = vmatprep.subr.mxu0 0.0
    %95 = vmatpush2.msra.mxu0 0.0
    %96 = vmatprep.subr.mxu0 0.0
    %97 = vmatpush2.msra.mxu0 0.0
    %98 = vmatprep.subr.mxu0 0.0
    %99 = vmatpush2.msra.mxu0 0.0
    %100 = vmatprep.subr.mxu0 0.0
    %101 = vmatpush2.msra.mxu0 0.0
    %102 = vmatprep.subr.mxu0 0.0
    %103 = vmatpush2.msra.mxu0 0.0
    %104 = vmatprep.subr.mxu0 0.0
    %105 = vmatpush2.msra.mxu0 0.0
    %106 = vmatprep.subr.mxu0 0.0
    %107 = vmatpush2.msra.mxu0 0.0
    %108 = vmatprep.subr.mxu0 0.0
    %109 = vmatpush2.msra.mxu0 0.0
    %110 = vmatprep.subr.mxu0 0.0
    %111 = vmatpush2.msra.mxu0 0.0
    %112 = vmatprep.subr.mxu0 0.0
    %113 = vmatpush2.msra.mxu0 0.0
    %114 = vmatprep.subr.mxu0 0.0
    %115 = vmatpush2.msra.mxu0 0.0
    %116 = vmatprep.subr.mxu0 0.0
    %117 = vmatpush2.msra.mxu0 0.0
    %118 = vmatprep.mubr.f32.mxu0 0.0
    %119 = vmatmul.mubr.f32.gmra.mxu0 %v45
    %v120 = vpop.f32.mrf.mxu0
    %v121 = vadd.f32 %v41, %v120
    %v122 = vpop.f32.mrf.mxu0
    %123 = vmatprep.mubr.f32.mxu0 0.0
    %124 = vmatmul.mubr.f32.gmra.mxu0 %v48
    %v125 = vpop.f32.mrf.mxu0
    %v126 = vadd.f32 %v41, %v125
    %v127 = vpop.f32.mrf.mxu0
    %128 = vdwg.mxu0
    %vm129 = vcmask 261120
    %v131 = vsel %vm129, 0.0, 0
    %133 = vmatprep.subr.mxu0 0.0
    %134 = vmatpush1.msra.mxu0 0.0
    %135 = vmatprep.subr.mxu0 0.0
    %136 = vmatpush1.msra.mxu0 0.0
    %137 = vmatprep.subr.mxu0 0.0
    %138 = vmatpush1.msra.mxu0 0.0
    %139 = vmatprep.subr.mxu0 0.0
    %140 = vmatpush1.msra.mxu0 0.0
    %141 = vmatprep.subr.mxu0 0.0
    %142 = vmatpush1.msra.mxu0 0.0
    %143 = vmatprep.subr.mxu0 0.0
    %144 = vmatpush1.msra.mxu0 0.0
    %145 = vmatprep.subr.mxu0 0.0
    %146 = vmatpush1.msra.mxu0 0.0
    %147 = vmatprep.subr.mxu0 0.0
    %148 = vmatpush1.msra.mxu0 0.0
    %149 = vmatprep.subr.mxu0 0.0
    %150 = vmatpush1.msra.mxu0 0.0
    %151 = vmatprep.subr.mxu0 0.0
    %152 = vmatpush1.msra.mxu0 0.0
    %153 = vmatprep.subr.mxu0 0.0
    %154 = vmatpush1.msra.mxu0 0.0
    %155 = vmatprep.subr.mxu0 0.0
    %156 = vmatpush1.msra.mxu0 0.0
    %157 = vmatprep.subr.mxu0 0.0
    %158 = vmatpush1.msra.mxu0 %v29
    %159 = vmatprep.subr.mxu0 0.0
    %160 = vmatpush1.msra.mxu0 %v28
    %161 = vmatprep.subr.mxu0 0.0
    %162 = vmatpush1.msra.mxu0 %v27
    %163 = vmatprep.subr.mxu0 0.0
    %164 = vmatpush1.msra.mxu0 %v26
    %165 = vmatprep.subr.mxu0 0.0
    %166 = vmatpush2.msra.mxu0 0.0
    %167 = vmatprep.subr.mxu0 0.0
    %168 = vmatpush2.msra.mxu0 0.0
    %169 = vmatprep.subr.mxu0 0.0
    %170 = vmatpush2.msra.mxu0 0.0
    %171 = vmatprep.subr.mxu0 0.0
    %172 = vmatpush2.msra.mxu0 0.0
    %173 = vmatprep.subr.mxu0 0.0
    %174 = vmatpush2.msra.mxu0 0.0
    %175 = vmatprep.subr.mxu0 0.0
    %176 = vmatpush2.msra.mxu0 0.0
    %177 = vmatprep.subr.mxu0 0.0
    %178 = vmatpush2.msra.mxu0 0.0
    %179 = vmatprep.subr.mxu0 0.0
    %180 = vmatpush2.msra.mxu0 0.0
    %181 = vmatprep.subr.mxu0 0.0
    %182 = vmatpush2.msra.mxu0 0.0
    %183 = vmatprep.subr.mxu0 0.0
    %184 = vmatpush2.msra.mxu0 0.0
    %185 = vmatprep.subr.mxu0 0.0
    %186 = vmatpush2.msra.mxu0 0.0
    %187 = vmatprep.subr.mxu0 0.0
    %188 = vmatpush2.msra.mxu0 0.0
    %189 = vmatprep.subr.mxu0 0.0
    %190 = vmatpush2.msra.mxu0 0.0
    %191 = vmatprep.subr.mxu0 0.0
    %192 = vmatpush2.msra.mxu0 0.0
    %193 = vmatprep.subr.mxu0 0.0
    %194 = vmatpush2.msra.mxu0 0.0
    %195 = vmatprep.subr.mxu0 0.0
    %196 = vmatpush2.msra.mxu0 0.0
    %197 = vmatprep.mubr.f32.mxu0 0.0
    %198 = vmatmul.mubr.f32.gmra.mxu0 %v131
    %v199 = vpop.f32.mrf.mxu0
    %v200 = vadd.f32 0.0, %v199
    %v201 = vpop.f32.mrf.mxu0
    %202 = vdwg.mxu0
    %v204 = vrot.slane %v200, 1
    %v207 = vadd.f32 %v121, %v200
    %v208 = vadd.f32 %v126, %v204
    %v209 = vxor.u32 %v207, 2147483648
    %v210 = vxor.u32 %v208, 2147483648
    %v211 = vmul.f32 %v209, 1.442695
    %v212 = vpow.pop %v211
    %v213 = vmul.f32 %v210, 1.442695
    %v214 = vpow.pop %v213
    %v215 = vadd.f32 %v212, 1.0
    %v216 = vadd.f32 %v214, 1.0
    %v217 = vrcp.pop %v215
    %v218 = vmul.f32 1.0, %v217
    %v219 = vrcp.pop %v216
    %v220 = vmul.f32 1.0, %v219
    %v221 = vtanh.pop %v207
    %v222 = vtanh.pop %v208
    %v223 = vmul.f32 %v218, 0.0
    %v224 = vmul.f32 %v220, 0.0
    %227 = vrot.lane.b32.xlu0 %v221, 64
    %v228 = vpop.permute.xlu0 %227
    %229 = vrot.lane.b32.xlu0 %v222, 64
    %v230 = vpop.permute.xlu0 %229
    %v233 = vmul.f32 %v218, %v228
    %v234 = vmul.f32 %v220, %v230
    %237 = vrot.lane.b32.xlu0 %v233, 32
    %v238 = vpop.permute.xlu0 %237
    %239 = vrot.lane.b32.xlu0 %v234, 32
    %v240 = vpop.permute.xlu0 %239
    %v243 = vadd.f32 %v223, %v238
    %v244 = vadd.f32 %v224, %v240
    %v245 = vtanh.pop %v243
    %v246 = vtanh.pop %v244
    %249 = vrot.lane.b32.xlu0 %v245, 64
    %v250 = vpop.permute.xlu0 %249
    %251 = vrot.lane.b32.xlu0 %v246, 64
    %v252 = vpop.permute.xlu0 %251
    %v255 = vmul.f32 %v218, %v250
    %v256 = vmul.f32 %v220, %v252
    %v259 = vrot.slane %v256, 7
    %vm260 = vcmask 1041409
    %v261 = vsel %vm260, %v259, %v255
    %262 = vrot.lane.b32.xlu0 %v261, 32
    %v263 = vpop.permute.xlu0 %262
    %v264 = vsel %vm129, %v263, 0
    %266 = vmatprep.subr.mxu0 0.0
    %267 = vmatpush1.msra.mxu0 0.0
    %268 = vmatprep.subr.mxu0 0.0
    %269 = vmatpush1.msra.mxu0 0.0
    %270 = vmatprep.subr.mxu0 0.0
    %271 = vmatpush1.msra.mxu0 0.0
    %272 = vmatprep.subr.mxu0 0.0
    %273 = vmatpush1.msra.mxu0 0.0
    %274 = vmatprep.subr.mxu0 0.0
    %275 = vmatpush1.msra.mxu0 0.0
    %276 = vmatprep.subr.mxu0 0.0
    %277 = vmatpush1.msra.mxu0 0.0
    %278 = vmatprep.subr.mxu0 0.0
    %279 = vmatpush1.msra.mxu0 0.0
    %280 = vmatprep.subr.mxu0 0.0
    %281 = vmatpush1.msra.mxu0 0.0
    %282 = vmatprep.subr.mxu0 0.0
    %283 = vmatpush1.msra.mxu0 0.0
    %284 = vmatprep.subr.mxu0 0.0
    %285 = vmatpush1.msra.mxu0 0.0
    %286 = vmatprep.subr.mxu0 0.0
    %287 = vmatpush1.msra.mxu0 0.0
    %288 = vmatprep.subr.mxu0 0.0
    %289 = vmatpush1.msra.mxu0 0.0
    %290 = vmatprep.subr.mxu0 0.0
    %291 = vmatpush1.msra.mxu0 %v29
    %292 = vmatprep.subr.mxu0 0.0
    %293 = vmatpush1.msra.mxu0 %v28
    %294 = vmatprep.subr.mxu0 0.0
    %295 = vmatpush1.msra.mxu0 %v27
    %296 = vmatprep.subr.mxu0 0.0
    %297 = vmatpush1.msra.mxu0 %v26
    %298 = vmatprep.subr.mxu0 0.0
    %299 = vmatpush2.msra.mxu0 0.0
    %300 = vmatprep.subr.mxu0 0.0
    %301 = vmatpush2.msra.mxu0 0.0
    %302 = vmatprep.subr.mxu0 0.0
    %303 = vmatpush2.msra.mxu0 0.0
    %304 = vmatprep.subr.mxu0 0.0
    %305 = vmatpush2.msra.mxu0 0.0
    %306 = vmatprep.subr.mxu0 0.0
    %307 = vmatpush2.msra.mxu0 0.0
    %308 = vmatprep.subr.mxu0 0.0
    %309 = vmatpush2.msra.mxu0 0.0
    %310 = vmatprep.subr.mxu0 0.0
    %311 = vmatpush2.msra.mxu0 0.0
    %312 = vmatprep.subr.mxu0 0.0
    %313 = vmatpush2.msra.mxu0 0.0
    %314 = vmatprep.subr.mxu0 0.0
    %315 = vmatpush2.msra.mxu0 0.0
    %316 = vmatprep.subr.mxu0 0.0
    %317 = vmatpush2.msra.mxu0 0.0
    %318 = vmatprep.subr.mxu0 0.0
    %319 = vmatpush2.msra.mxu0 0.0
    %320 = vmatprep.subr.mxu0 0.0
    %321 = vmatpush2.msra.mxu0 0.0
    %322 = vmatprep.subr.mxu0 0.0
    %323 = vmatpush2.msra.mxu0 0.0
    %324 = vmatprep.subr.mxu0 0.0
    %325 = vmatpush2.msra.mxu0 0.0
    %326 = vmatprep.subr.mxu0 0.0
    %327 = vmatpush2.msra.mxu0 0.0
    %328 = vmatprep.subr.mxu0 0.0
    %329 = vmatpush2.msra.mxu0 0.0
    %330 = vmatprep.mubr.f32.mxu0 0.0
    %331 = vmatmul.mubr.f32.gmra.mxu0 %v264
    %v332 = vpop.f32.mrf.mxu0
    %v333 = vadd.f32 0.0, %v332
    %v334 = vpop.f32.mrf.mxu0
    %335 = vdwg.mxu0
    %v337 = vrot.slane %v333, 7
    %v340 = vadd.f32 %v121, %v337
    %v341 = vadd.f32 %v126, %v333
    %v342 = vxor.u32 %v340, 2147483648
    %v343 = vxor.u32 %v341, 2147483648
    %v344 = vmul.f32 %v342, 1.442695
    %v345 = vpow.pop %v344
    %v346 = vmul.f32 %v343, 1.442695
    %v347 = vpow.pop %v346
    %v348 = vadd.f32 %v345, 1.0
    %v349 = vadd.f32 %v347, 1.0
    %v350 = vrcp.pop %v348
    %v351 = vmul.f32 1.0, %v350
    %v352 = vrcp.pop %v349
    %v353 = vmul.f32 1.0, %v352
    %v354 = vtanh.pop %v340
    %v355 = vtanh.pop %v341
    %v358 = vrot.slane %v243, 7
    %v359 = vrot.slane %v244, 7
    %v362 = vmul.f32 %v351, %v358
    %v363 = vmul.f32 %v353, %v359
    %366 = vrot.lane.b32.xlu0 %v354, 64
    %v367 = vpop.permute.xlu0 %366
    %368 = vrot.lane.b32.xlu0 %v355, 64
    %v369 = vpop.permute.xlu0 %368
    %v372 = vmul.f32 %v351, %v367
    %v373 = vmul.f32 %v353, %v369
    %376 = vrot.lane.b32.xlu0 %v372, 32
    %v377 = vpop.permute.xlu0 %376
    %378 = vrot.lane.b32.xlu0 %v373, 32
    %v379 = vpop.permute.xlu0 %378
    %v382 = vadd.f32 %v362, %v377
    %v383 = vadd.f32 %v363, %v379
    %v384 = vtanh.pop %v382
    %v385 = vtanh.pop %v383
    %388 = vrot.lane.b32.xlu0 %v384, 64
    %v389 = vpop.permute.xlu0 %388
    %390 = vrot.lane.b32.xlu0 %v385, 64
    %v391 = vpop.permute.xlu0 %390
    %v394 = vmul.f32 %v351, %v389
    %v395 = vmul.f32 %v353, %v391
    %v398 = vrot.slane %v394, 1
    %v399 = vsel %vm260, %v395, %v398
    %400 = vrot.lane.b32.xlu0 %v399, 32
    %v401 = vpop.permute.xlu0 %400
    %v402 = vsel %vm129, %v401, 0
    %404 = vmatprep.subr.mxu0 0.0
    %405 = vmatpush1.msra.mxu0 0.0
    %406 = vmatprep.subr.mxu0 0.0
    %407 = vmatpush1.msra.mxu0 0.0
    %408 = vmatprep.subr.mxu0 0.0
    %409 = vmatpush1.msra.mxu0 0.0
    %410 = vmatprep.subr.mxu0 0.0
    %411 = vmatpush1.msra.mxu0 0.0
    %412 = vmatprep.subr.mxu0 0.0
    %413 = vmatpush1.msra.mxu0 0.0
    %414 = vmatprep.subr.mxu0 0.0
    %415 = vmatpush1.msra.mxu0 0.0
    %416 = vmatprep.subr.mxu0 0.0
    %417 = vmatpush1.msra.mxu0 0.0
    %418 = vmatprep.subr.mxu0 0.0
    %419 = vmatpush1.msra.mxu0 0.0
    %420 = vmatprep.subr.mxu0 0.0
    %421 = vmatpush1.msra.mxu0 0.0
    %422 = vmatprep.subr.mxu0 0.0
    %423 = vmatpush1.msra.mxu0 0.0
    %424 = vmatprep.subr.mxu0 0.0
    %425 = vmatpush1.msra.mxu0 0.0
    %426 = vmatprep.subr.mxu0 0.0
    %427 = vmatpush1.msra.mxu0 0.0
    %428 = vmatprep.subr.mxu0 0.0
    %429 = vmatpush1.msra.mxu0 %v29
    %430 = vmatprep.subr.mxu0 0.0
    %431 = vmatpush1.msra.mxu0 %v28
    %432 = vmatprep.subr.mxu0 0.0
    %433 = vmatpush1.msra.mxu0 %v27
    %434 = vmatprep.subr.mxu0 0.0
    %435 = vmatpush1.msra.mxu0 %v26
    %436 = vmatprep.subr.mxu0 0.0
    %437 = vmatpush2.msra.mxu0 0.0
    %438 = vmatprep.subr.mxu0 0.0
    %439 = vmatpush2.msra.mxu0 0.0
    %440 = vmatprep.subr.mxu0 0.0
    %441 = vmatpush2.msra.mxu0 0.0
    %442 = vmatprep.subr.mxu0 0.0
    %443 = vmatpush2.msra.mxu0 0.0
    %444 = vmatprep.subr.mxu0 0.0
    %445 = vmatpush2.msra.mxu0 0.0
    %446 = vmatprep.subr.mxu0 0.0
    %447 = vmatpush2.msra.mxu0 0.0
    %448 = vmatprep.subr.mxu0 0.0
    %449 = vmatpush2.msra.mxu0 0.0
    %450 = vmatprep.subr.mxu0 0.0
    %451 = vmatpush2.msra.mxu0 0.0
    %452 = vmatprep.subr.mxu0 0.0
    %453 = vmatpush2.msra.mxu0 0.0
    %454 = vmatprep.subr.mxu0 0.0
    %455 = vmatpush2.msra.mxu0 0.0
    %456 = vmatprep.subr.mxu0 0.0
    %457 = vmatpush2.msra.mxu0 0.0
    %458 = vmatprep.subr.mxu0 0.0
    %459 = vmatpush2.msra.mxu0 0.0
    %460 = vmatprep.subr.mxu0 0.0
    %461 = vmatpush2.msra.mxu0 0.0
    %462 = vmatprep.subr.mxu0 0.0
    %463 = vmatpush2.msra.mxu0 0.0
    %464 = vmatprep.subr.mxu0 0.0
    %465 = vmatpush2.msra.mxu0 0.0
    %466 = vmatprep.subr.mxu0 0.0
    %467 = vmatpush2.msra.mxu0 0.0
    %468 = vmatprep.mubr.f32.mxu0 0.0
    %469 = vmatmul.mubr.f32.gmra.mxu0 %v402
    %v470 = vpop.f32.mrf.mxu0
    %v471 = vadd.f32 0.0, %v470
    %v472 = vpop.f32.mrf.mxu0
    %473 = vdwg.mxu0
    %v475 = vrot.slane %v471, 6
    %v476 = vrot.slane %v471, 7
    %v479 = vadd.f32 %v121, %v475
    %v480 = vadd.f32 %v126, %v476
    %v481 = vxor.u32 %v479, 2147483648
    %v482 = vxor.u32 %v480, 2147483648
    %v483 = vmul.f32 %v481, 1.442695
    %v484 = vpow.pop %v483
    %v485 = vmul.f32 %v482, 1.442695
    %v486 = vpow.pop %v485
    %v487 = vadd.f32 %v484, 1.0
    %v488 = vadd.f32 %v486, 1.0
    %v489 = vrcp.pop %v487
    %v490 = vmul.f32 1.0, %v489
    %v491 = vrcp.pop %v488
    %v492 = vmul.f32 1.0, %v491
    %v493 = vtanh.pop %v479
    %v494 = vtanh.pop %v480
    %v497 = vrot.slane %v382, 7
    %v498 = vrot.slane %v383, 7
    %v501 = vmul.f32 %v490, %v497
    %v502 = vmul.f32 %v492, %v498
    %505 = vrot.lane.b32.xlu0 %v493, 64
    %v506 = vpop.permute.xlu0 %505
    %507 = vrot.lane.b32.xlu0 %v494, 64
    %v508 = vpop.permute.xlu0 %507
    %v511 = vmul.f32 %v490, %v506
    %v512 = vmul.f32 %v492, %v508
    %515 = vrot.lane.b32.xlu0 %v511, 32
    %v516 = vpop.permute.xlu0 %515
    %517 = vrot.lane.b32.xlu0 %v512, 32
    %v518 = vpop.permute.xlu0 %517
    %v521 = vadd.f32 %v501, %v516
    %v522 = vadd.f32 %v502, %v518
    %v523 = vtanh.pop %v521
    %v524 = vtanh.pop %v522
    %527 = vrot.lane.b32.xlu0 %v523, 64
    %v528 = vpop.permute.xlu0 %527
    %529 = vrot.lane.b32.xlu0 %v524, 64
    %v530 = vpop.permute.xlu0 %529
    %v533 = vmul.f32 %v490, %v528
    %v534 = vmul.f32 %v492, %v530
    %v537 = vrot.slane %v533, 2
    %v538 = vrot.slane %v534, 1
    %v539 = vsel %vm260, %v538, %v537
    %540 = vrot.lane.b32.xlu0 %v539, 32
    %v541 = vpop.permute.xlu0 %540
    %v542 = vsel %vm129, %v541, 0
    %544 = vmatprep.subr.mxu0 0.0
    %545 = vmatpush1.msra.mxu0 0.0
    %546 = vmatprep.subr.mxu0 0.0
    %547 = vmatpush1.msra.mxu0 0.0
    %548 = vmatprep.subr.mxu0 0.0
    %549 = vmatpush1.msra.mxu0 0.0
    %550 = vmatprep.subr.mxu0 0.0
    %551 = vmatpush1.msra.mxu0 0.0
    %552 = vmatprep.subr.mxu0 0.0
    %553 = vmatpush1.msra.mxu0 0.0
    %554 = vmatprep.subr.mxu0 0.0
    %555 = vmatpush1.msra.mxu0 0.0
    %556 = vmatprep.subr.mxu0 0.0
    %557 = vmatpush1.msra.mxu0 0.0
    %558 = vmatprep.subr.mxu0 0.0
    %559 = vmatpush1.msra.mxu0 0.0
    %560 = vmatprep.subr.mxu0 0.0
    %561 = vmatpush1.msra.mxu0 0.0
    %562 = vmatprep.subr.mxu0 0.0
    %563 = vmatpush1.msra.mxu0 0.0
    %564 = vmatprep.subr.mxu0 0.0
    %565 = vmatpush1.msra.mxu0 0.0
    %566 = vmatprep.subr.mxu0 0.0
    %567 = vmatpush1.msra.mxu0 0.0
    %568 = vmatprep.subr.mxu0 0.0
    %569 = vmatpush1.msra.mxu0 %v29
    %570 = vmatprep.subr.mxu0 0.0
    %571 = vmatpush1.msra.mxu0 %v28
    %572 = vmatprep.subr.mxu0 0.0
    %573 = vmatpush1.msra.mxu0 %v27
    %574 = vmatprep.subr.mxu0 0.0
    %575 = vmatpush1.msra.mxu0 %v26
    %576 = vmatprep.subr.mxu0 0.0
    %577 = vmatpush2.msra.mxu0 0.0
    %578 = vmatprep.subr.mxu0 0.0
    %579 = vmatpush2.msra.mxu0 0.0
    %580 = vmatprep.subr.mxu0 0.0
    %581 = vmatpush2.msra.mxu0 0.0
    %582 = vmatprep.subr.mxu0 0.0
    %583 = vmatpush2.msra.mxu0 0.0
    %584 = vmatprep.subr.mxu0 0.0
    %585 = vmatpush2.msra.mxu0 0.0
    %586 = vmatprep.subr.mxu0 0.0
    %587 = vmatpush2.msra.mxu0 0.0
    %588 = vmatprep.subr.mxu0 0.0
    %589 = vmatpush2.msra.mxu0 0.0
    %590 = vmatprep.subr.mxu0 0.0
    %591 = vmatpush2.msra.mxu0 0.0
    %592 = vmatprep.subr.mxu0 0.0
    %593 = vmatpush2.msra.mxu0 0.0
    %594 = vmatprep.subr.mxu0 0.0
    %595 = vmatpush2.msra.mxu0 0.0
    %596 = vmatprep.subr.mxu0 0.0
    %597 = vmatpush2.msra.mxu0 0.0
    %598 = vmatprep.subr.mxu0 0.0
    %599 = vmatpush2.msra.mxu0 0.0
    %600 = vmatprep.subr.mxu0 0.0
    %601 = vmatpush2.msra.mxu0 0.0
    %602 = vmatprep.subr.mxu0 0.0
    %603 = vmatpush2.msra.mxu0 0.0
    %604 = vmatprep.subr.mxu0 0.0
    %605 = vmatpush2.msra.mxu0 0.0
    %606 = vmatprep.subr.mxu0 0.0
    %607 = vmatpush2.msra.mxu0 0.0
    %608 = vmatprep.mubr.f32.mxu0 0.0
    %609 = vmatmul.mubr.f32.gmra.mxu0 %v542
    %v610 = vpop.f32.mrf.mxu0
    %v611 = vadd.f32 0.0, %v610
    %v612 = vpop.f32.mrf.mxu0
    %613 = vdwg.mxu0
    %v615 = vrot.slane %v611, 5
    %v616 = vrot.slane %v611, 6
    %v619 = vadd.f32 %v121, %v615
    %v620 = vadd.f32 %v126, %v616
    %v621 = vxor.u32 %v619, 2147483648
    %v622 = vxor.u32 %v620, 2147483648
    %v623 = vmul.f32 %v621, 1.442695
    %v624 = vpow.pop %v623
    %v625 = vmul.f32 %v622, 1.442695
    %v626 = vpow.pop %v625
    %v627 = vadd.f32 %v624, 1.0
    %v628 = vadd.f32 %v626, 1.0
    %v629 = vrcp.pop %v627
    %v630 = vmul.f32 1.0, %v629
    %v631 = vrcp.pop %v628
    %v632 = vmul.f32 1.0, %v631
    %v633 = vtanh.pop %v619
    %v634 = vtanh.pop %v620
    %v637 = vrot.slane %v521, 7
    %v638 = vrot.slane %v522, 7
    %v641 = vmul.f32 %v630, %v637
    %v642 = vmul.f32 %v632, %v638
    %645 = vrot.lane.b32.xlu0 %v633, 64
    %v646 = vpop.permute.xlu0 %645
    %647 = vrot.lane.b32.xlu0 %v634, 64
    %v648 = vpop.permute.xlu0 %647
    %v651 = vmul.f32 %v630, %v646
    %v652 = vmul.f32 %v632, %v648
    %655 = vrot.lane.b32.xlu0 %v651, 32
    %v656 = vpop.permute.xlu0 %655
    %657 = vrot.lane.b32.xlu0 %v652, 32
    %v658 = vpop.permute.xlu0 %657
    %v661 = vadd.f32 %v641, %v656
    %v662 = vadd.f32 %v642, %v658
    %v663 = vtanh.pop %v661
    %v664 = vtanh.pop %v662
    %667 = vrot.lane.b32.xlu0 %v663, 64
    %v668 = vpop.permute.xlu0 %667
    %669 = vrot.lane.b32.xlu0 %v664, 64
    %v670 = vpop.permute.xlu0 %669
    %v673 = vmul.f32 %v630, %v668
    %v674 = vmul.f32 %v632, %v670
    %v677 = vrot.slane %v673, 3
    %v678 = vrot.slane %v674, 2
    %v679 = vsel %vm260, %v678, %v677
    %680 = vrot.lane.b32.xlu0 %v679, 32
    %v681 = vpop.permute.xlu0 %680
    %v682 = vsel %vm129, %v681, 0
    %684 = vmatprep.subr.mxu0 0.0
    %685 = vmatpush1.msra.mxu0 0.0
    %686 = vmatprep.subr.mxu0 0.0
    %687 = vmatpush1.msra.mxu0 0.0
    %688 = vmatprep.subr.mxu0 0.0
    %689 = vmatpush1.msra.mxu0 0.0
    %690 = vmatprep.subr.mxu0 0.0
    %691 = vmatpush1.msra.mxu0 0.0
    %692 = vmatprep.subr.mxu0 0.0
    %693 = vmatpush1.msra.mxu0 0.0
    %694 = vmatprep.subr.mxu0 0.0
    %695 = vmatpush1.msra.mxu0 0.0
    %696 = vmatprep.subr.mxu0 0.0
    %697 = vmatpush1.msra.mxu0 0.0
    %698 = vmatprep.subr.mxu0 0.0
    %699 = vmatpush1.msra.mxu0 0.0
    %700 = vmatprep.subr.mxu0 0.0
    %701 = vmatpush1.msra.mxu0 0.0
    %702 = vmatprep.subr.mxu0 0.0
    %703 = vmatpush1.msra.mxu0 0.0
    %704 = vmatprep.subr.mxu0 0.0
    %705 = vmatpush1.msra.mxu0 0.0
    %706 = vmatprep.subr.mxu0 0.0
    %707 = vmatpush1.msra.mxu0 0.0
    %708 = vmatprep.subr.mxu0 0.0
    %709 = vmatpush1.msra.mxu0 %v29
    %710 = vmatprep.subr.mxu0 0.0
    %711 = vmatpush1.msra.mxu0 %v28
    %712 = vmatprep.subr.mxu0 0.0
    %713 = vmatpush1.msra.mxu0 %v27
    %714 = vmatprep.subr.mxu0 0.0
    %715 = vmatpush1.msra.mxu0 %v26
    %716 = vmatprep.subr.mxu0 0.0
    %717 = vmatpush2.msra.mxu0 0.0
    %718 = vmatprep.subr.mxu0 0.0
    %719 = vmatpush2.msra.mxu0 0.0
    %720 = vmatprep.subr.mxu0 0.0
    %721 = vmatpush2.msra.mxu0 0.0
    %722 = vmatprep.subr.mxu0 0.0
    %723 = vmatpush2.msra.mxu0 0.0
    %724 = vmatprep.subr.mxu0 0.0
    %725 = vmatpush2.msra.mxu0 0.0
    %726 = vmatprep.subr.mxu0 0.0
    %727 = vmatpush2.msra.mxu0 0.0
    %728 = vmatprep.subr.mxu0 0.0
    %729 = vmatpush2.msra.mxu0 0.0
    %730 = vmatprep.subr.mxu0 0.0
    %731 = vmatpush2.msra.mxu0 0.0
    %732 = vmatprep.subr.mxu0 0.0
    %733 = vmatpush2.msra.mxu0 0.0
    %734 = vmatprep.subr.mxu0 0.0
    %735 = vmatpush2.msra.mxu0 0.0
    %736 = vmatprep.subr.mxu0 0.0
    %737 = vmatpush2.msra.mxu0 0.0
    %738 = vmatprep.subr.mxu0 0.0
    %739 = vmatpush2.msra.mxu0 0.0
    %740 = vmatprep.subr.mxu0 0.0
    %741 = vmatpush2.msra.mxu0 0.0
    %742 = vmatprep.subr.mxu0 0.0
    %743 = vmatpush2.msra.mxu0 0.0
    %744 = vmatprep.subr.mxu0 0.0
    %745 = vmatpush2.msra.mxu0 0.0
    %746 = vmatprep.subr.mxu0 0.0
    %747 = vmatpush2.msra.mxu0 0.0
    %748 = vmatprep.mubr.f32.mxu0 0.0
    %749 = vmatmul.mubr.f32.gmra.mxu0 %v682
    %v750 = vpop.f32.mrf.mxu0
    %v751 = vadd.f32 0.0, %v750
    %v752 = vpop.f32.mrf.mxu0
    %753 = vdwg.mxu0
    %v755 = vrot.slane %v751, 4
    %v756 = vrot.slane %v751, 5
    %v759 = vadd.f32 %v121, %v755
    %v760 = vadd.f32 %v126, %v756
    %v761 = vxor.u32 %v759, 2147483648
    %v762 = vxor.u32 %v760, 2147483648
    %v763 = vmul.f32 %v761, 1.442695
    %v764 = vpow.pop %v763
    %v765 = vmul.f32 %v762, 1.442695
    %v766 = vpow.pop %v765
    %v767 = vadd.f32 %v764, 1.0
    %v768 = vadd.f32 %v766, 1.0
    %v769 = vrcp.pop %v767
    %v770 = vmul.f32 1.0, %v769
    %v771 = vrcp.pop %v768
    %v772 = vmul.f32 1.0, %v771
    %v773 = vtanh.pop %v759
    %v774 = vtanh.pop %v760
    %v777 = vrot.slane %v661, 7
    %v778 = vrot.slane %v662, 7
    %v781 = vmul.f32 %v770, %v777
    %v782 = vmul.f32 %v772, %v778
    %785 = vrot.lane.b32.xlu0 %v773, 64
    %v786 = vpop.permute.xlu0 %785
    %787 = vrot.lane.b32.xlu0 %v774, 64
    %v788 = vpop.permute.xlu0 %787
    %v791 = vmul.f32 %v770, %v786
    %v792 = vmul.f32 %v772, %v788
    %795 = vrot.lane.b32.xlu0 %v791, 32
    %v796 = vpop.permute.xlu0 %795
    %797 = vrot.lane.b32.xlu0 %v792, 32
    %v798 = vpop.permute.xlu0 %797
    %v801 = vadd.f32 %v781, %v796
    %v802 = vadd.f32 %v782, %v798
    %v803 = vtanh.pop %v801
    %v804 = vtanh.pop %v802
    %807 = vrot.lane.b32.xlu0 %v803, 64
    %v808 = vpop.permute.xlu0 %807
    %809 = vrot.lane.b32.xlu0 %v804, 64
    %v810 = vpop.permute.xlu0 %809
    %v813 = vmul.f32 %v770, %v808
    %v814 = vmul.f32 %v772, %v810
    %v817 = vrot.slane %v813, 4
    %v818 = vrot.slane %v814, 3
    %v819 = vsel %vm260, %v818, %v817
    %820 = vrot.lane.b32.xlu0 %v819, 32
    %v821 = vpop.permute.xlu0 %820
    %v822 = vsel %vm129, %v821, 0
    %824 = vmatprep.subr.mxu0 0.0
    %825 = vmatpush1.msra.mxu0 0.0
    %826 = vmatprep.subr.mxu0 0.0
    %827 = vmatpush1.msra.mxu0 0.0
    %828 = vmatprep.subr.mxu0 0.0
    %829 = vmatpush1.msra.mxu0 0.0
    %830 = vmatprep.subr.mxu0 0.0
    %831 = vmatpush1.msra.mxu0 0.0
    %832 = vmatprep.subr.mxu0 0.0
    %833 = vmatpush1.msra.mxu0 0.0
    %834 = vmatprep.subr.mxu0 0.0
    %835 = vmatpush1.msra.mxu0 0.0
    %836 = vmatprep.subr.mxu0 0.0
    %837 = vmatpush1.msra.mxu0 0.0
    %838 = vmatprep.subr.mxu0 0.0
    %839 = vmatpush1.msra.mxu0 0.0
    %840 = vmatprep.subr.mxu0 0.0
    %841 = vmatpush1.msra.mxu0 0.0
    %842 = vmatprep.subr.mxu0 0.0
    %843 = vmatpush1.msra.mxu0 0.0
    %844 = vmatprep.subr.mxu0 0.0
    %845 = vmatpush1.msra.mxu0 0.0
    %846 = vmatprep.subr.mxu0 0.0
    %847 = vmatpush1.msra.mxu0 0.0
    %848 = vmatprep.subr.mxu0 0.0
    %849 = vmatpush1.msra.mxu0 %v29
    %850 = vmatprep.subr.mxu0 0.0
    %851 = vmatpush1.msra.mxu0 %v28
    %852 = vmatprep.subr.mxu0 0.0
    %853 = vmatpush1.msra.mxu0 %v27
    %854 = vmatprep.subr.mxu0 0.0
    %855 = vmatpush1.msra.mxu0 %v26
    %856 = vmatprep.subr.mxu0 0.0
    %857 = vmatpush2.msra.mxu0 0.0
    %858 = vmatprep.subr.mxu0 0.0
    %859 = vmatpush2.msra.mxu0 0.0
    %860 = vmatprep.subr.mxu0 0.0
    %861 = vmatpush2.msra.mxu0 0.0
    %862 = vmatprep.subr.mxu0 0.0
    %863 = vmatpush2.msra.mxu0 0.0
    %864 = vmatprep.subr.mxu0 0.0
    %865 = vmatpush2.msra.mxu0 0.0
    %866 = vmatprep.subr.mxu0 0.0
    %867 = vmatpush2.msra.mxu0 0.0
    %868 = vmatprep.subr.mxu0 0.0
    %869 = vmatpush2.msra.mxu0 0.0
    %870 = vmatprep.subr.mxu0 0.0
    %871 = vmatpush2.msra.mxu0 0.0
    %872 = vmatprep.subr.mxu0 0.0
    %873 = vmatpush2.msra.mxu0 0.0
    %874 = vmatprep.subr.mxu0 0.0
    %875 = vmatpush2.msra.mxu0 0.0
    %876 = vmatprep.subr.mxu0 0.0
    %877 = vmatpush2.msra.mxu0 0.0
    %878 = vmatprep.subr.mxu0 0.0
    %879 = vmatpush2.msra.mxu0 0.0
    %880 = vmatprep.subr.mxu0 0.0
    %881 = vmatpush2.msra.mxu0 0.0
    %882 = vmatprep.subr.mxu0 0.0
    %883 = vmatpush2.msra.mxu0 0.0
    %884 = vmatprep.subr.mxu0 0.0
    %885 = vmatpush2.msra.mxu0 0.0
    %886 = vmatprep.subr.mxu0 0.0
    %887 = vmatpush2.msra.mxu0 0.0
    %888 = vmatprep.mubr.f32.mxu0 0.0
    %889 = vmatmul.mubr.f32.gmra.mxu0 %v822
    %v890 = vpop.f32.mrf.mxu0
    %v891 = vadd.f32 0.0, %v890
    %v892 = vpop.f32.mrf.mxu0
    %893 = vdwg.mxu0
    %v895 = vrot.slane %v891, 3
    %v896 = vrot.slane %v891, 4
    %v899 = vadd.f32 %v121, %v895
    %v900 = vadd.f32 %v126, %v896
    %v901 = vxor.u32 %v899, 2147483648
    %v902 = vxor.u32 %v900, 2147483648
    %v903 = vmul.f32 %v901, 1.442695
    %v904 = vpow.pop %v903
    %v905 = vmul.f32 %v902, 1.442695
    %v906 = vpow.pop %v905
    %v907 = vadd.f32 %v904, 1.0
    %v908 = vadd.f32 %v906, 1.0
    %v909 = vrcp.pop %v907
    %v910 = vmul.f32 1.0, %v909
    %v911 = vrcp.pop %v908
    %v912 = vmul.f32 1.0, %v911
    %v913 = vtanh.pop %v899
    %v914 = vtanh.pop %v900
    %v917 = vrot.slane %v801, 7
    %v918 = vrot.slane %v802, 7
    %v921 = vmul.f32 %v910, %v917
    %v922 = vmul.f32 %v912, %v918
    %925 = vrot.lane.b32.xlu0 %v913, 64
    %v926 = vpop.permute.xlu0 %925
    %927 = vrot.lane.b32.xlu0 %v914, 64
    %v928 = vpop.permute.xlu0 %927
    %v931 = vmul.f32 %v910, %v926
    %v932 = vmul.f32 %v912, %v928
    %935 = vrot.lane.b32.xlu0 %v931, 32
    %v936 = vpop.permute.xlu0 %935
    %937 = vrot.lane.b32.xlu0 %v932, 32
    %v938 = vpop.permute.xlu0 %937
    %v941 = vadd.f32 %v921, %v936
    %v942 = vadd.f32 %v922, %v938
    %v943 = vtanh.pop %v941
    %v944 = vtanh.pop %v942
    %947 = vrot.lane.b32.xlu0 %v943, 64
    %v948 = vpop.permute.xlu0 %947
    %949 = vrot.lane.b32.xlu0 %v944, 64
    %v950 = vpop.permute.xlu0 %949
    %v953 = vmul.f32 %v910, %v948
    %v954 = vmul.f32 %v912, %v950
    %v957 = vrot.slane %v953, 5
    %v958 = vrot.slane %v954, 4
    %v959 = vsel %vm260, %v958, %v957
    %960 = vrot.lane.b32.xlu0 %v959, 32
    %v961 = vpop.permute.xlu0 %960
    %v962 = vsel %vm129, %v961, 0
    %964 = vmatprep.subr.mxu0 0.0
    %965 = vmatpush1.msra.mxu0 0.0
    %966 = vmatprep.subr.mxu0 0.0
    %967 = vmatpush1.msra.mxu0 0.0
    %968 = vmatprep.subr.mxu0 0.0
    %969 = vmatpush1.msra.mxu0 0.0
    %970 = vmatprep.subr.mxu0 0.0
    %971 = vmatpush1.msra.mxu0 0.0
    %972 = vmatprep.subr.mxu0 0.0
    %973 = vmatpush1.msra.mxu0 0.0
    %974 = vmatprep.subr.mxu0 0.0
    %975 = vmatpush1.msra.mxu0 0.0
    %976 = vmatprep.subr.mxu0 0.0
    %977 = vmatpush1.msra.mxu0 0.0
    %978 = vmatprep.subr.mxu0 0.0
    %979 = vmatpush1.msra.mxu0 0.0
    %980 = vmatprep.subr.mxu0 0.0
    %981 = vmatpush1.msra.mxu0 0.0
    %982 = vmatprep.subr.mxu0 0.0
    %983 = vmatpush1.msra.mxu0 0.0
    %984 = vmatprep.subr.mxu0 0.0
    %985 = vmatpush1.msra.mxu0 0.0
    %986 = vmatprep.subr.mxu0 0.0
    %987 = vmatpush1.msra.mxu0 0.0
    %988 = vmatprep.subr.mxu0 0.0
    %989 = vmatpush1.msra.mxu0 %v29
    %990 = vmatprep.subr.mxu0 0.0
    %991 = vmatpush1.msra.mxu0 %v28
    %992 = vmatprep.subr.mxu0 0.0
    %993 = vmatpush1.msra.mxu0 %v27
    %994 = vmatprep.subr.mxu0 0.0
    %995 = vmatpush1.msra.mxu0 %v26
    %996 = vmatprep.subr.mxu0 0.0
    %997 = vmatpush2.msra.mxu0 0.0
    %998 = vmatprep.subr.mxu0 0.0
    %999 = vmatpush2.msra.mxu0 0.0
    %1000 = vmatprep.subr.mxu0 0.0
    %1001 = vmatpush2.msra.mxu0 0.0
    %1002 = vmatprep.subr.mxu0 0.0
    %1003 = vmatpush2.msra.mxu0 0.0
    %1004 = vmatprep.subr.mxu0 0.0
    %1005 = vmatpush2.msra.mxu0 0.0
    %1006 = vmatprep.subr.mxu0 0.0
    %1007 = vmatpush2.msra.mxu0 0.0
    %1008 = vmatprep.subr.mxu0 0.0
    %1009 = vmatpush2.msra.mxu0 0.0
    %1010 = vmatprep.subr.mxu0 0.0
    %1011 = vmatpush2.msra.mxu0 0.0
    %1012 = vmatprep.subr.mxu0 0.0
    %1013 = vmatpush2.msra.mxu0 0.0
    %1014 = vmatprep.subr.mxu0 0.0
    %1015 = vmatpush2.msra.mxu0 0.0
    %1016 = vmatprep.subr.mxu0 0.0
    %1017 = vmatpush2.msra.mxu0 0.0
    %1018 = vmatprep.subr.mxu0 0.0
    %1019 = vmatpush2.msra.mxu0 0.0
    %1020 = vmatprep.subr.mxu0 0.0
    %1021 = vmatpush2.msra.mxu0 0.0
    %1022 = vmatprep.subr.mxu0 0.0
    %1023 = vmatpush2.msra.mxu0 0.0
    %1024 = vmatprep.subr.mxu0 0.0
    %1025 = vmatpush2.msra.mxu0 0.0
    %1026 = vmatprep.subr.mxu0 0.0
    %1027 = vmatpush2.msra.mxu0 0.0
    %1028 = vmatprep.mubr.f32.mxu0 0.0
    %1029 = vmatmul.mubr.f32.gmra.mxu0 %v962
    %v1030 = vpop.f32.mrf.mxu0
    %v1031 = vadd.f32 0.0, %v1030
    %v1032 = vpop.f32.mrf.mxu0
    %1033 = vdwg.mxu0
    %v1035 = vrot.slane %v1031, 2
    %v1036 = vrot.slane %v1031, 3
    %v1039 = vadd.f32 %v121, %v1035
    %v1040 = vadd.f32 %v126, %v1036
    %v1041 = vxor.u32 %v1039, 2147483648
    %v1042 = vxor.u32 %v1040, 2147483648
    %v1043 = vmul.f32 %v1041, 1.442695
    %v1044 = vpow.pop %v1043
    %v1045 = vmul.f32 %v1042, 1.442695
    %v1046 = vpow.pop %v1045
    %v1047 = vadd.f32 %v1044, 1.0
    %v1048 = vadd.f32 %v1046, 1.0
    %v1049 = vrcp.pop %v1047
    %v1050 = vmul.f32 1.0, %v1049
    %v1051 = vrcp.pop %v1048
    %v1052 = vmul.f32 1.0, %v1051
    %v1053 = vtanh.pop %v1039
    %v1054 = vtanh.pop %v1040
    %v1057 = vrot.slane %v941, 7
    %v1058 = vrot.slane %v942, 7
    %v1061 = vmul.f32 %v1050, %v1057
    %v1062 = vmul.f32 %v1052, %v1058
    %1065 = vrot.lane.b32.xlu0 %v1053, 64
    %v1066 = vpop.permute.xlu0 %1065
    %1067 = vrot.lane.b32.xlu0 %v1054, 64
    %v1068 = vpop.permute.xlu0 %1067
    %v1071 = vmul.f32 %v1050, %v1066
    %v1072 = vmul.f32 %v1052, %v1068
    %1075 = vrot.lane.b32.xlu0 %v1071, 32
    %v1076 = vpop.permute.xlu0 %1075
    %1077 = vrot.lane.b32.xlu0 %v1072, 32
    %v1078 = vpop.permute.xlu0 %1077
    %v1081 = vadd.f32 %v1061, %v1076
    %v1082 = vadd.f32 %v1062, %v1078
    %v1083 = vtanh.pop %v1081
    %v1084 = vtanh.pop %v1082
    %1087 = vrot.lane.b32.xlu0 %v1083, 64
    %v1088 = vpop.permute.xlu0 %1087
    %1089 = vrot.lane.b32.xlu0 %v1084, 64
    %v1090 = vpop.permute.xlu0 %1089
    %v1093 = vmul.f32 %v1050, %v1088
    %v1094 = vmul.f32 %v1052, %v1090
    %v1097 = vrot.slane %v1093, 6
    %v1098 = vrot.slane %v1094, 5
    %v1099 = vsel %vm260, %v1098, %v1097
    %1100 = vrot.lane.b32.xlu0 %v1099, 32
    %v1101 = vpop.permute.xlu0 %1100
    %v1102 = vsel %vm129, %v1101, 0
    %1104 = vmatprep.subr.mxu0 0.0
    %1105 = vmatpush1.msra.mxu0 0.0
    %1106 = vmatprep.subr.mxu0 0.0
    %1107 = vmatpush1.msra.mxu0 0.0
    %1108 = vmatprep.subr.mxu0 0.0
    %1109 = vmatpush1.msra.mxu0 0.0
    %1110 = vmatprep.subr.mxu0 0.0
    %1111 = vmatpush1.msra.mxu0 0.0
    %1112 = vmatprep.subr.mxu0 0.0
    %1113 = vmatpush1.msra.mxu0 0.0
    %1114 = vmatprep.subr.mxu0 0.0
    %1115 = vmatpush1.msra.mxu0 0.0
    %1116 = vmatprep.subr.mxu0 0.0
    %1117 = vmatpush1.msra.mxu0 0.0
    %1118 = vmatprep.subr.mxu0 0.0
    %1119 = vmatpush1.msra.mxu0 0.0
    %1120 = vmatprep.subr.mxu0 0.0
    %1121 = vmatpush1.msra.mxu0 0.0
    %1122 = vmatprep.subr.mxu0 0.0
    %1123 = vmatpush1.msra.mxu0 0.0
    %1124 = vmatprep.subr.mxu0 0.0
    %1125 = vmatpush1.msra.mxu0 0.0
    %1126 = vmatprep.subr.mxu0 0.0
    %1127 = vmatpush1.msra.mxu0 0.0
    %1128 = vmatprep.subr.mxu0 0.0
    %1129 = vmatpush1.msra.mxu0 %v29
    %1130 = vmatprep.subr.mxu0 0.0
    %1131 = vmatpush1.msra.mxu0 %v28
    %1132 = vmatprep.subr.mxu0 0.0
    %1133 = vmatpush1.msra.mxu0 %v27
    %1134 = vmatprep.subr.mxu0 0.0
    %1135 = vmatpush1.msra.mxu0 %v26
    %1136 = vmatprep.subr.mxu0 0.0
    %1137 = vmatpush2.msra.mxu0 0.0
    %1138 = vmatprep.subr.mxu0 0.0
    %1139 = vmatpush2.msra.mxu0 0.0
    %1140 = vmatprep.subr.mxu0 0.0
    %1141 = vmatpush2.msra.mxu0 0.0
    %1142 = vmatprep.subr.mxu0 0.0
    %1143 = vmatpush2.msra.mxu0 0.0
    %1144 = vmatprep.subr.mxu0 0.0
    %1145 = vmatpush2.msra.mxu0 0.0
    %1146 = vmatprep.subr.mxu0 0.0
    %1147 = vmatpush2.msra.mxu0 0.0
    %1148 = vmatprep.subr.mxu0 0.0
    %1149 = vmatpush2.msra.mxu0 0.0
    %1150 = vmatprep.subr.mxu0 0.0
    %1151 = vmatpush2.msra.mxu0 0.0
    %1152 = vmatprep.subr.mxu0 0.0
    %1153 = vmatpush2.msra.mxu0 0.0
    %1154 = vmatprep.subr.mxu0 0.0
    %1155 = vmatpush2.msra.mxu0 0.0
    %1156 = vmatprep.subr.mxu0 0.0
    %1157 = vmatpush2.msra.mxu0 0.0
    %1158 = vmatprep.subr.mxu0 0.0
    %1159 = vmatpush2.msra.mxu0 0.0
    %1160 = vmatprep.subr.mxu0 0.0
    %1161 = vmatpush2.msra.mxu0 0.0
    %1162 = vmatprep.subr.mxu0 0.0
    %1163 = vmatpush2.msra.mxu0 0.0
    %1164 = vmatprep.subr.mxu0 0.0
    %1165 = vmatpush2.msra.mxu0 0.0
    %1166 = vmatprep.subr.mxu0 0.0
    %1167 = vmatpush2.msra.mxu0 0.0
    %1168 = vmatprep.mubr.f32.mxu0 0.0
    %1169 = vmatmul.mubr.f32.gmra.mxu0 %v1102
    %v1170 = vpop.f32.mrf.mxu0
    %v1171 = vadd.f32 0.0, %v1170
    %v1172 = vpop.f32.mrf.mxu0
    %1173 = vdwg.mxu0
    %v1175 = vrot.slane %v1171, 1
    %v1176 = vrot.slane %v1171, 2
    %v1179 = vadd.f32 %v121, %v1175
    %v1180 = vadd.f32 %v126, %v1176
    %v1181 = vxor.u32 %v1179, 2147483648
    %v1182 = vxor.u32 %v1180, 2147483648
    %v1183 = vmul.f32 %v1181, 1.442695
    %v1184 = vpow.pop %v1183
    %v1185 = vmul.f32 %v1182, 1.442695
    %v1186 = vpow.pop %v1185
    %v1187 = vadd.f32 %v1184, 1.0
    %v1188 = vadd.f32 %v1186, 1.0
    %v1189 = vrcp.pop %v1187
    %v1190 = vmul.f32 1.0, %v1189
    %v1191 = vrcp.pop %v1188
    %v1192 = vmul.f32 1.0, %v1191
    %v1193 = vtanh.pop %v1179
    %v1194 = vtanh.pop %v1180
    %v1197 = vrot.slane %v1081, 7
    %v1198 = vrot.slane %v1082, 7
    %v1201 = vmul.f32 %v1190, %v1197
    %v1202 = vmul.f32 %v1192, %v1198
    %1205 = vrot.lane.b32.xlu0 %v1193, 64
    %v1206 = vpop.permute.xlu0 %1205
    %1207 = vrot.lane.b32.xlu0 %v1194, 64
    %v1208 = vpop.permute.xlu0 %1207
    %v1211 = vmul.f32 %v1190, %v1206
    %v1212 = vmul.f32 %v1192, %v1208
    %1215 = vrot.lane.b32.xlu0 %v1211, 32
    %v1216 = vpop.permute.xlu0 %1215
    %1217 = vrot.lane.b32.xlu0 %v1212, 32
    %v1218 = vpop.permute.xlu0 %1217
    %v1221 = vadd.f32 %v1201, %v1216
    %v1222 = vadd.f32 %v1202, %v1218
    %v1223 = vtanh.pop %v1221
    %v1224 = vtanh.pop %v1222
    %1227 = vrot.lane.b32.xlu0 %v1223, 64
    %v1228 = vpop.permute.xlu0 %1227
    %1229 = vrot.lane.b32.xlu0 %v1224, 64
    %v1230 = vpop.permute.xlu0 %1229
    %v1233 = vmul.f32 %v1190, %v1228
    %v1234 = vmul.f32 %v1192, %v1230
    %v1236 = vlaneseq
    %v1237 = vshrl.u32 %v1236, 7
    %v1238 = vsub.s32 0, %v1237
    %v1239 = vrot.slane %v34, %v1238
    %v1243 = vrot.slane %v1233, 7
    %v1244 = vrot.slane %v1234, 6
    %v1245 = vsel %vm260, %v1244, %v1243
    %1246 = vrot.lane.b32.xlu0 %v1245, 32
    %v1247 = vpop.permute.xlu0 %1246
    %v1248 = vsel %vm129, %v1247, 0
    %1250 = vmatprep.subr.mxu0 0.0
    %1251 = vmatpush1.msra.mxu0 0.0
    %1252 = vmatprep.subr.mxu0 0.0
    %1253 = vmatpush1.msra.mxu0 0.0
    %1254 = vmatprep.subr.mxu0 0.0
    %1255 = vmatpush1.msra.mxu0 0.0
    %1256 = vmatprep.subr.mxu0 0.0
    %1257 = vmatpush1.msra.mxu0 0.0
    %1258 = vmatprep.subr.mxu0 0.0
    %1259 = vmatpush1.msra.mxu0 0.0
    %1260 = vmatprep.subr.mxu0 0.0
    %1261 = vmatpush1.msra.mxu0 0.0
    %1262 = vmatprep.subr.mxu0 0.0
    %1263 = vmatpush1.msra.mxu0 0.0
    %1264 = vmatprep.subr.mxu0 0.0
    %1265 = vmatpush1.msra.mxu0 0.0
    %1266 = vmatprep.subr.mxu0 0.0
    %1267 = vmatpush1.msra.mxu0 0.0
    %1268 = vmatprep.subr.mxu0 0.0
    %1269 = vmatpush1.msra.mxu0 0.0
    %1270 = vmatprep.subr.mxu0 0.0
    %1271 = vmatpush1.msra.mxu0 0.0
    %1272 = vmatprep.subr.mxu0 0.0
    %1273 = vmatpush1.msra.mxu0 0.0
    %1274 = vmatprep.subr.mxu0 0.0
    %1275 = vmatpush1.msra.mxu0 %v33
    %1276 = vmatprep.subr.mxu0 0.0
    %1277 = vmatpush1.msra.mxu0 %v32
    %1278 = vmatprep.subr.mxu0 0.0
    %1279 = vmatpush1.msra.mxu0 %v31
    %1280 = vmatprep.subr.mxu0 0.0
    %1281 = vmatpush1.msra.mxu0 %v30
    %1282 = vmatprep.subr.mxu0 0.0
    %1283 = vmatpush2.msra.mxu0 0.0
    %1284 = vmatprep.subr.mxu0 0.0
    %1285 = vmatpush2.msra.mxu0 0.0
    %1286 = vmatprep.subr.mxu0 0.0
    %1287 = vmatpush2.msra.mxu0 0.0
    %1288 = vmatprep.subr.mxu0 0.0
    %1289 = vmatpush2.msra.mxu0 0.0
    %1290 = vmatprep.subr.mxu0 0.0
    %1291 = vmatpush2.msra.mxu0 0.0
    %1292 = vmatprep.subr.mxu0 0.0
    %1293 = vmatpush2.msra.mxu0 0.0
    %1294 = vmatprep.subr.mxu0 0.0
    %1295 = vmatpush2.msra.mxu0 0.0
    %1296 = vmatprep.subr.mxu0 0.0
    %1297 = vmatpush2.msra.mxu0 0.0
    %1298 = vmatprep.subr.mxu0 0.0
    %1299 = vmatpush2.msra.mxu0 0.0
    %1300 = vmatprep.subr.mxu0 0.0
    %1301 = vmatpush2.msra.mxu0 0.0
    %1302 = vmatprep.subr.mxu0 0.0
    %1303 = vmatpush2.msra.mxu0 0.0
    %1304 = vmatprep.subr.mxu0 0.0
    %1305 = vmatpush2.msra.mxu0 0.0
    %1306 = vmatprep.subr.mxu0 0.0
    %1307 = vmatpush2.msra.mxu0 0.0
    %1308 = vmatprep.subr.mxu0 0.0
    %1309 = vmatpush2.msra.mxu0 0.0
    %1310 = vmatprep.subr.mxu0 0.0
    %1311 = vmatpush2.msra.mxu0 0.0
    %1312 = vmatprep.subr.mxu0 0.0
    %1313 = vmatpush2.msra.mxu0 0.0
    %1314 = vmatprep.mubr.f32.mxu0 0.0
    %1315 = vmatmul.mubr.f32.gmra.mxu0 %v1248
    %v1316 = vpop.f32.mrf.mxu0
    %v1317 = vadd.f32 %v1239, %v1316
    %v1318 = vpop.f32.mrf.mxu0
    %1319 = vdwg.mxu0
    %vm1320 = vcmask 58368
    %1321 = vst.msk [vmem:[#allocation2] sm:$0x3] %vm1320, %v1317
    // Predicated region
    $region26: #{tpu_custom_call.1} parent=1 // pred_check
      _
    $region27: #{tpu_custom_call.1} parent=1 // pred_check_branch
      %1323 = sbr.rel (0) target = $region29
    $region28: #{tpu_custom_call.1} parent=1 // pred_region
      %s1325 = ssub.s32 32, 32
      %1326 = vsyncadd [#allocation3], %s1325
      %s1328 = sshll.u32 [#allocation2], 4
      %s1329 = int_to_ptr.vmem [resolvable:$true] %s1328
      %1331 = dma.vmem_to_hbm [thread:$0]  %s1329, 32, %s6, [#allocation3]
    $region29: #{tpu_custom_call.1} parent=1 // pred_fallthru
      _
    // Predicated region
    $region30: #{tpu_custom_call.1} parent=1 // pred_check
      _
    $region31: #{tpu_custom_call.1} parent=1 // pred_check_branch
      %1333 = sbr.rel (0) target = $region33
    $region32: #{tpu_custom_call.1} parent=1 // pred_region
      %1334 = dma.done [#allocation3], 32
    $region33: #{tpu_custom_call.1} parent=1 // pred_fallthru
      _
    %1335 = vsyncpa [#allocation3], 1

</llo_original>
